<compile_context>
chip_gen: v6e
topology: v6e:2x2x1
jax: 0.10.0
libtpu: 0.0.40
codegen_flags: <defaults>
</compile_context>

<pallas_src>
import functools

import numpy as np
import jax
import jax.numpy as jnp
from jax.experimental import pallas as pl
from jax.experimental.pallas import tpu as pltpu

CHANNEL_N = 16
CELL_FIRE_RATE = 0.5
HIDDEN = 128


def _make_perception_filters():
    """Replicates the fixed perception filters of NCAModel3D.  Shape (3,3,3,4)."""
    identify = np.zeros((3, 3, 3), np.float32)
    identify[1, 1, 1] = 1.0
    smooth = np.array([1, 2, 1], np.float32)
    sobel = np.outer([1, 2, 1], [-1, 0, 1]).astype(np.float32)          # (3,3)
    dx = smooth[None, None, :] * sobel[:, :, None]
    dy = smooth[None, None, :] * sobel.T[:, :, None]
    dz = (smooth[None, None, :] * sobel.T[:, :, None]).T                # full transpose
    return np.stack([identify, dx, dy, dz], axis=-1)                    # (3,3,3,4)


@functools.lru_cache(maxsize=None)
def _pltpu_roll_is_numpy_convention():
    """One-time probe of pltpu.roll's rotation direction (guards the deriv sign)."""
    def k(x_ref, o_ref):
        o_ref[...] = pltpu.roll(x_ref[...], 1, 1)
    x = jnp.tile(jnp.arange(128, dtype=jnp.float32)[None, :], (8, 1))
    out = pl.pallas_call(k, out_shape=jax.ShapeDtypeStruct((8, 128), jnp.float32))(x)
    return bool(np.asarray(out)[0, 0] == 127.0)   # np.roll(x, 1)[0] == x[-1]


def _nca_kernel(x_ref, rnd_ref, w1_ref, b1_ref, w2_ref, b2_ref, p_ref, q_ref,
                out_ref, *, C, fire_rate, m_tile, roll_like_numpy):
    xb = x_ref[...]                              # (bt, D, H, W*C) f32, lane-dense
    bt, D, H, WC = xb.shape
    W = WC // C
    M = bt * D * H
    NEG = jnp.float32(-jnp.inf)

    # ----------------- shift helpers -----------------
    def lane_shift(a2, s):
        # circular shift along the folded (W*C) lane axis of a 2-D array:
        # out[:, l] = a2[:, (l + s) % WC]   (pltpu.roll -> XLU, no copies)
        r = (-s) % WC if roll_like_numpy else s % WC
        return pltpu.roll(a2, r, axis=1)

    def shift_circ(a, s, axis):
        # circular shift along D (axis 1) or H (axis 2): out[i] = a[(i + s) % n]
        n = a.shape[axis]
        t = s % n
        if t == 0:
            return a
        lo = [slice(None)] * a.ndim
        hi = [slice(None)] * a.ndim
        lo[axis] = slice(t, None)
        hi[axis] = slice(0, t)
        return jnp.concatenate([a[tuple(lo)], a[tuple(hi)]], axis=axis)

    def shift_fill(a, s, axis, fill):
        # non-circular shift (out-of-range -> fill), s in {+1, -1}
        n = a.shape[axis]
        sl = [slice(None)] * a.ndim
        pad_shape = list(a.shape)
        pad_shape[axis] = abs(s)
        pad = jnp.full(pad_shape, fill, a.dtype)
        if s > 0:
            sl[axis] = slice(s, None)
            return jnp.concatenate([a[tuple(sl)], pad], axis=axis)
        sl[axis] = slice(0, n + s)
        return jnp.concatenate([pad, a[tuple(sl)]], axis=axis)

    # ----------------- perception (separable, circular boundary) -----------------
    # identify = Id, dx = S_D (x) Dv_H (x) S_W, dy = Dv_D (x) S_H (x) S_W,
    # dz = S_D (x) S_H (x) Dv_W   with S = [1,2,1], Dv = [-1,0,1].
    x2 = xb.reshape(M, WC)

    def smooth_lane(a2):   # along W (lanes): x[w-1] + 2*x[w] + x[w+1]
        return lane_shift(a2, C) + lane_shift(a2, -C) + 2.0 * a2

    def deriv_lane(a2):    # along W (lanes): x[w+1] - x[w-1]
        return lane_shift(a2, C) - lane_shift(a2, -C)

    def smooth_ax(a, ax):
        return shift_circ(a, 1, ax) + shift_circ(a, -1, ax) + 2.0 * a

    def deriv_ax(a, ax):
        return shift_circ(a, 1, ax) - shift_circ(a, -1, ax)

    sD = smooth_ax(xb, 1)                                            # S_D x
    f1 = smooth_lane(deriv_ax(sD, 2).reshape(M, WC))                 # dx
    f3 = deriv_lane(smooth_ax(sD, 2).reshape(M, WC))                 # dz
    f2 = smooth_lane(smooth_ax(deriv_ax(xb, 1), 2).reshape(M, WC))   # dy
    perc = jnp.concatenate([x2, f1, f2, f3], axis=1)                 # (M, 4*W*C)

    # ----------------- 3x3x3 max-pool (separable, -inf padding) -----------------
    lane = jax.lax.broadcasted_iota(jnp.int32, (M, WC), 1)

    def maxpool3(a):                                                 # (bt, D, H, WC)
        a2 = a.reshape(M, WC)
        up = jnp.where(lane < (W - 1) * C, lane_shift(a2, C), NEG)   # a[w+1]
        dn = jnp.where(lane >= C, lane_shift(a2, -C), NEG)           # a[w-1]
        m = jnp.maximum(a2, jnp.maximum(up, dn)).reshape(bt, D, H, WC)
        m = jnp.maximum(m, jnp.maximum(shift_fill(m, 1, 2, NEG),
                                       shift_fill(m, -1, 2, NEG)))   # H
        m = jnp.maximum(m, jnp.maximum(shift_fill(m, 1, 1, NEG),
                                       shift_fill(m, -1, 1, NEG)))   # D
        return m.reshape(M, WC)

    pooled_pre = maxpool3(xb)

    # ----------------- fire mask: exact 0/1 floats, broadcast across C via MXU --
    rnd2 = rnd_ref[...].reshape(M, W)
    fire_small = (rnd2 <= jnp.float32(fire_rate)).astype(jnp.float32)   # (M, W)
    fire_f = jnp.dot(fire_small, q_ref[...],
                     preferred_element_type=jnp.float32)                # (M, WC) 0/1

    # ----------------- 1x1x1 convs as lane-folded block-diagonal matmuls --------
    # step_size already folded into w2/b2 by the wrapper.
    w1 = w1_ref[...]
    b1 = b1_ref[...]
    w2 = w2_ref[...]
    b2 = b2_ref[...]
    chunks = []
    for r0 in range(0, M, m_tile):
        r1 = min(r0 + m_tile, M)
        h = jnp.maximum(jnp.dot(perc[r0:r1], w1,
                                preferred_element_type=jnp.float32) + b1, 0.0)
        d = jnp.dot(h, w2, preferred_element_type=jnp.float32) + b2      # (rows, WC)
        chunks.append(x2[r0:r1] + d * fire_f[r0:r1])                     # x += dx*mask
    x_new = chunks[0] if len(chunks) == 1 else jnp.concatenate(chunks, axis=0)

    # ----------------- life mask (alpha lane select+broadcast via MXU) ----------
    pooled_post = maxpool3(x_new.reshape(bt, D, H, WC))
    alive_small = (jnp.minimum(pooled_pre, pooled_post)
                   > jnp.float32(0.1)).astype(jnp.float32)               # per channel
    alive_f = jnp.dot(alive_small, p_ref[...],
                      preferred_element_type=jnp.float32)                # (M, WC) 0/1
    out_ref[...] = (x_new * alive_f).reshape(bt, D, H, WC)


def _pick_batch_block(B, bytes_per_batch, target_bytes=2 << 20):
    """Largest batch sub-block that divides B, keeps the block <= ~2 MiB and, when
    possible, leaves >= 2 grid steps (v7x has 2 TensorCores to feed)."""
    cands = [bt for bt in range(1, B + 1)
             if B % bt == 0 and bt * bytes_per_batch <= target_bytes]
    if not cands:
        return 1
    two_step = [bt for bt in cands if B // bt >= 2]
    return max(two_step) if two_step else max(cands)


def nca_forward_pallas(x, rnd, weight1, bias1, weight2, bias2,
                       *, fire_rate=CELL_FIRE_RATE, step_size=1.0):
    """x: (B, 16, D, H, W) f32; rnd: (B, 1, D, H, W) uniform [0,1).
    weight1: (128, 64), bias1: (128,), weight2: (16, 128), bias2: (16,)."""
    B, C, D, H, W = x.shape
    assert C == CHANNEL_N
    WC = W * C
    HID = int(weight1.shape[0])
    assert weight1.shape == (HID, 4 * C) and weight2.shape == (C, HID)
    assert WC % 128 == 0, "fold W*C to a multiple of the 128-lane vreg width"

    # lane-dense NDHWC slab: (B, D, H, W*C) -- free contiguous reshape
    xk = jnp.transpose(x, (0, 2, 3, 4, 1)).astype(jnp.float32).reshape(B, D, H, WC)
    rk = jnp.asarray(rnd, jnp.float32).reshape(B, D, H, W)

    # ---- weight prep (host side, numpy) ----
    w1 = np.asarray(weight1, np.float32)       # (HID, 64), in-channel o = 4*c + f
    w2 = np.asarray(weight2, np.float32)       # (C, HID)
    b1 = np.asarray(bias1, np.float32)
    b2 = np.asarray(bias2, np.float32)
    ss = np.float32(step_size)

    # block-diagonal folded weights: perc lane index = f*WC + w*C + c,
    # hidden lane index = w*HID + j, output lane index = w*C + c.
    w1_bd = np.zeros((4 * WC, W * HID), np.float32)
    for f in range(4):
        blk = w1[:, 4 * np.arange(C) + f].T                 # (C, HID)
        for w in range(W):
            w1_bd[f * WC + w * C:f * WC + (w + 1) * C,
                  w * HID:(w + 1) * HID] = blk
    w2_bd = np.zeros((W * HID, WC), np.float32)
    blk2 = w2.T * ss                                        # step_size folded in
    for w in range(W):
        w2_bd[w * HID:(w + 1) * HID, w * C:(w + 1) * C] = blk2
    b1_t = np.tile(b1, W)[None, :]                          # (1, W*HID)
    b2_t = (np.tile(b2, W) * ss)[None, :]                   # (1, WC)

    # 0/1 matrices: p_alpha selects the alpha lane per w-block and broadcasts it;
    # q_bcast broadcasts a per-voxel scalar across the C lanes of its w-block.
    p_alpha = np.zeros((WC, WC), np.float32)
    q_bcast = np.zeros((W, WC), np.float32)
    for w in range(W):
        p_alpha[w * C + 3, w * C:(w + 1) * C] = 1.0
        q_bcast[w, w * C:(w + 1) * C] = 1.0

    bt = _pick_batch_block(B, D * H * WC * 4)
    grid = (B // bt,)
    M = bt * D * H
    m_tile = M if M <= 512 else 512

    kernel = functools.partial(
        _nca_kernel, C=C, fire_rate=float(fire_rate), m_tile=m_tile,
        roll_like_numpy=_pltpu_roll_is_numpy_convention())

    out = pl.pallas_call(
        kernel,
        out_shape=jax.ShapeDtypeStruct((B, D, H, WC), jnp.float32),
        grid=grid,
        in_specs=[
            pl.BlockSpec((bt, D, H, WC), lambda b: (b, 0, 0, 0)),
            pl.BlockSpec((bt, D, H, W), lambda b: (b, 0, 0, 0)),
            pl.BlockSpec((4 * WC, W * HID), lambda b: (0, 0)),
            pl.BlockSpec((1, W * HID), lambda b: (0, 0)),
            pl.BlockSpec((W * HID, WC), lambda b: (0, 0)),
            pl.BlockSpec((1, WC), lambda b: (0, 0)),
            pl.BlockSpec((WC, WC), lambda b: (0, 0)),
            pl.BlockSpec((W, WC), lambda b: (0, 0)),
        ],
        out_specs=pl.BlockSpec((bt, D, H, WC), lambda b: (b, 0, 0, 0)),
        compiler_params=pltpu.CompilerParams(
            dimension_semantics=("parallel",),
            vmem_limit_bytes=32 * 1024 * 1024),
    )(xk, rk, jnp.asarray(w1_bd), jnp.asarray(b1_t), jnp.asarray(w2_bd),
      jnp.asarray(b2_t), jnp.asarray(p_alpha), jnp.asarray(q_bcast))

    out = out.reshape(B, D, H, W, C)
    return jnp.transpose(out, (0, 4, 1, 2, 3))              # back to NCDHW


def nca_reference(x, rnd, weight_perc, weight1, bias1, weight2, bias2,
                  fire_rate, step_size):
    """Plain-JAX reference with PyTorch semantics (NCDHW)."""
    hp = jax.lax.Precision.HIGHEST

    def living_mask(v):
        alpha = v[:, 3:4]
        pooled = jax.lax.reduce_window(
            alpha, -jnp.inf, jax.lax.max,
            (1, 1, 3, 3, 3), (1, 1, 1, 1, 1),
            [(0, 0), (0, 0), (1, 1), (1, 1), (1, 1)])
        return pooled > 0.1

    pre = living_mask(x)
    xp = jnp.pad(x, ((0, 0), (0, 0), (1, 1), (1, 1), (1, 1)), mode='wrap')
    perc = jax.lax.conv_general_dilated(
        xp, weight_perc, window_strides=(1, 1, 1), padding='VALID',
        dimension_numbers=('NCDHW', 'OIDHW', 'NCDHW'),
        feature_group_count=CHANNEL_N, precision=hp)
    h = jnp.einsum('oc,bcdhw->bodhw', weight1, perc,
                   precision=hp) + bias1[None, :, None, None, None]
    h = jnp.maximum(h, 0.0)
    dx = jnp.einsum('oc,bcdhw->bodhw', weight2, h,
                    precision=hp) + bias2[None, :, None, None, None]
    dx = dx * step_size
    update = (rnd <= fire_rate).astype(jnp.float32)
    x_new = x + dx * update
    post = living_mask(x_new)
    life = jnp.logical_and(pre, post)
    return x_new * life.astype(jnp.float32)


if __name__ == "__main__":
    key = jax.random.PRNGKey(0)
    B, C, D, H, W = 2, CHANNEL_N, 8, 8, 8
    k1, k2, k3, k4, k5, k6, k7 = jax.random.split(key, 7)

    x = jax.random.normal(k1, (B, C, D, H, W), jnp.float32) * 0.5
    x = x.at[:, 3].set(jax.random.uniform(k2, (B, D, H, W), jnp.float32))  # alpha
    # TODO(synk): torch.rand of the fire mask is drawn host-side (jax.random) and
    # passed in; the <= fire_rate threshold and masking happen inside the kernel.
    rnd = jax.random.uniform(k3, (B, 1, D, H, W), jnp.float32)

    # deterministic init of the two 1x1x1 convs (Conv3d(64,128,1), Conv3d(128,16,1))
    weight1 = jax.random.normal(k4, (HIDDEN, 4 * CHANNEL_N), jnp.float32) * 0.1
    bias1 = jax.random.normal(k5, (HIDDEN,), jnp.float32) * 0.1
    weight2 = jax.random.normal(k6, (CHANNEL_N, HIDDEN), jnp.float32) * 0.1
    bias2 = jax.random.normal(k7, (CHANNEL_N,), jnp.float32) * 0.1

    step_size = 0.7
    out = nca_forward_pallas(x, rnd, weight1, bias1, weight2, bias2,
                             fire_rate=CELL_FIRE_RATE, step_size=step_size)
    out = jax.block_until_ready(out)

    # reference check (perception weight in PyTorch layout: (64, 1, 3, 3, 3))
    filters = _make_perception_filters()
    wp = np.zeros((4 * CHANNEL_N, 1, 3, 3, 3), np.float32)
    for o in range(4 * CHANNEL_N):
        wp[o, 0] = filters[:, :, :, o % 4]
    ref = nca_reference(x, rnd, jnp.asarray(wp), weight1, bias1, weight2, bias2,
                        CELL_FIRE_RATE, step_size)
    ref = jax.block_until_ready(ref)

    assert out.shape == (B, C, D, H, W)
    assert np.allclose(np.asarray(out), np.asarray(ref), atol=1e-4, rtol=1e-4)
    print("KERNEL_OK")
</pallas_src>

<mosaic_0001>
module attributes {stable_mosaic.version = 11 : i64} {
  func.func @k(%arg0: memref<8x128xf32, #tpu.memory_space<vmem>>, %arg1: memref<8x128xf32, #tpu.memory_space<vmem>>) attributes {dimension_semantics = [], scalar_prefetch = 0 : i64, scratch_operands = 0 : i64, tpu.core_type = #tpu.core_type<tc>} {
    %c0 = arith.constant 0 : index
    %c0_0 = arith.constant 0 : index
    %0 = vector.load %arg0[%c0, %c0_0] : memref<8x128xf32, #tpu.memory_space<vmem>>, vector<8x128xf32>
    %c1_i32 = arith.constant 1 : i32
    %1 = tpu.dynamic_rotate %0 by %c1_i32 dim 1 : vector<8x128xf32>, i32 -> vector<8x128xf32>
    %c0_1 = arith.constant 0 : index
    %c0_2 = arith.constant 0 : index
    %2 = vector.load %arg1[%c0_1, %c0_2] : memref<8x128xf32, #tpu.memory_space<vmem>>, vector<8x128xf32>
    tpu.vector_store %arg1[%c0_1, %c0_2], %1 {strides = array<i32>} : memref<8x128xf32, #tpu.memory_space<vmem>>, vector<8x128xf32>,
    return
  }
}

</mosaic_0001>

<llo_original>
// kernel: tpu_custom_call.1
$region0: #{tpu_custom_call.1}
  #allocation0 [shape = 'u32[]', space=smem, size = 0x4, offset = 0x4, fixed_abs, tag = 'smem constant byte address 0x4 - core index']
  #allocation1 [shape = 'u32[144,128]{1,0:T(1,128)}', space=vmem, size = 0x12000, scoped, tag = 'internal scratch']
  %s0 = inlined_call_operand.hbm [shape: f32[8,128], index: 0, kind: input, shape index: {}]
  %s1 = inlined_call_operand.hbm [shape: f32[8,128], index: 1, kind: output, shape index: {}]
  %s2 = sld [smem:[#allocation0]]
  $region18: #{tpu_custom_call.1} parent=0
    _
  %s4 = ssub.s32 1, %s2
  %s5 = scalar_select 0, %s4, %s2
  $region1: #{tpu_custom_call.1} parent=0
    #allocation2 [shape = 'u8[4096]{0}', space=vmem, size = 0x1000, scoped, tag = 'input window, operand 0, single buffered']
    #allocation3 [shape = 's32[1]{0}', space=sflag, size = 0x4, scoped, tag = 'scoped memory for tpu_custom_call.1']
    #allocation4 [shape = 's32[1]{0}', space=sflag, size = 0x4, scoped, tag = 'scoped memory for tpu_custom_call.1']
    #allocation5 [shape = 'u8[4096]{0}', space=vmem, size = 0x1000, scoped, tag = 'output window, operand 0, single buffered']
    %6 = vsyncpa [#allocation3], 0
    %7 = vsyncpa [#allocation4], 0
    // Predicated region
    $region2: #{tpu_custom_call.1} parent=1 // pred_check
      _
    $region3: #{tpu_custom_call.1} parent=1 // pred_check_branch
      %9 = sbr.rel (0) target = $region5
    $region4: #{tpu_custom_call.1} parent=1 // pred_region
      %s11 = ssub.s32 128, 128
      %12 = vsyncadd [#allocation3], %s11
      %s14 = sshll.u32 [#allocation2], 4
      %s15 = int_to_ptr.vmem [resolvable:$true] %s14
      %17 = dma.hbm_to_vmem [thread:$0]  %s0, 128, %s15, [#allocation3]
    $region5: #{tpu_custom_call.1} parent=1 // pred_fallthru
      _
    // Predicated region
    $region6: #{tpu_custom_call.1} parent=1 // pred_check
      _
    $region7: #{tpu_custom_call.1} parent=1 // pred_check_branch
      %19 = sbr.rel (0) target = $region9
    $region8: #{tpu_custom_call.1} parent=1 // pred_region
      %20 = dma.done [#allocation3], 128
    $region9: #{tpu_custom_call.1} parent=1 // pred_fallthru
      _
    %v21 = vld [vmem:[#allocation2] sm:$0xff]
    %22 = vrot.lane.b32.xlu0 %v21, 1
    %v23 = vpop.permute.xlu0 %22
    %24 = vst [vmem:[#allocation5] sm:$0xff] %v23
    // Predicated region
    $region10: #{tpu_custom_call.1} parent=1 // pred_check
      _
    $region11: #{tpu_custom_call.1} parent=1 // pred_check_branch
      %26 = sbr.rel (0) target = $region13
    $region12: #{tpu_custom_call.1} parent=1 // pred_region
      %s28 = ssub.s32 128, 128
      %29 = vsyncadd [#allocation4], %s28
      %s31 = sshll.u32 [#allocation5], 4
      %s32 = int_to_ptr.vmem [resolvable:$true] %s31
      %34 = dma.vmem_to_hbm [thread:$0]  %s32, 128, %s1, [#allocation4]
    $region13: #{tpu_custom_call.1} parent=1 // pred_fallthru
      _
    // Predicated region
    $region14: #{tpu_custom_call.1} parent=1 // pred_check
      _
    $region15: #{tpu_custom_call.1} parent=1 // pred_check_branch
      %36 = sbr.rel (0) target = $region17
    $region16: #{tpu_custom_call.1} parent=1 // pred_region
      %37 = dma.done [#allocation4], 128
    $region17: #{tpu_custom_call.1} parent=1 // pred_fallthru
      _
    %38 = vsyncpa [#allocation3], 1
    %39 = vsyncpa [#allocation4], 1

</llo_original>
